<compile_context>
chip_gen: v7x
topology: tpu7x:2x2x1
jax: 0.10.0
libtpu: 0.0.40
codegen_flags: <defaults>
</compile_context>

<pallas_src>
import math

import jax
import jax.numpy as jnp
from jax import lax
from jax.experimental import pallas as pl
from jax.experimental.pallas import tpu as pltpu


# ----------------------------------------------------------------------------
# Kernel 1: fused QKV projection, channels-major input, (S, C) bf16 outputs
# ----------------------------------------------------------------------------
def _qkv_proj_kernel(x_ref, w_ref, b_ref, q_ref, k_ref, v_ref):
    """x_ref : (1, C, TS) f32   activation tile in channels-major layout
       w_ref : (C, 3C)   bf16  fused [Wq|Wk|Wv], stored (in, out); Q slice is
                               pre-scaled by 1/sqrt(d_head)
       b_ref : (1, 3C)   f32   fused bias (Q slice pre-scaled)
       q/k/v_ref : (1, TS, C) bf16 outputs
    """
    c = q_ref.shape[-1]
    x_cs = x_ref[0].astype(jnp.bfloat16)                       # (C, TS)

    # TN dot_general: contract the channel dim of both operands -> (TS, 3C).
    # (Mosaic lowers the transposed-LHS form natively; no XLU transpose of the
    # activation tile is materialized.)
    qkv = lax.dot_general(
        x_cs, w_ref[...],
        (((0,), (0,)), ((), ())),
        preferred_element_type=jnp.float32)
    qkv = (qkv + b_ref[...]).astype(jnp.bfloat16)               # (TS, 3C)

    q_ref[0] = qkv[:, 0 * c:1 * c]
    k_ref[0] = qkv[:, 1 * c:2 * c]
    v_ref[0] = qkv[:, 2 * c:3 * c]


# ----------------------------------------------------------------------------
# Kernel 2: attention (K/V fully resident) + out_proj + residual,
#           channels-major output
# ----------------------------------------------------------------------------
def _attn_kernel(xres_ref, q_ref, k_ref, v_ref, wo_ref, bo_ref, o_ref):
    """xres_ref : (1, C, TQ)  f32  residual tile (channels-major)
       q_ref    : (1, TQ, C)  bf16 (already scaled by 1/sqrt(d_head))
       k_ref    : (1, S,  C)  bf16  full K for this batch element
       v_ref    : (1, S,  C)  bf16  full V for this batch element
       wo_ref   : (C, C)      bf16  out_proj weight, PyTorch (out, in) layout
       bo_ref   : (C, 1)      f32   out_proj bias as a column
       o_ref    : (1, C, TQ)  f32   output tile (channels-major)
    """
    q = q_ref[0]                                                # (TQ, C) bf16
    k = k_ref[0]                                                # (S,  C) bf16
    v = v_ref[0]                                                # (S,  C) bf16

    # scores: NT dot_general, contract channel dims -> (TQ, S); no transpose.
    s = lax.dot_general(q, k, (((1,), (1,)), ((), ())),
                        preferred_element_type=jnp.float32)

    # single-pass softmax over the full key axis (K/V resident, no online stats)
    m = jnp.max(s, axis=-1, keepdims=True)                      # (TQ, 1)
    p = jnp.exp(s - m)                                          # EUP
    l = jnp.sum(p, axis=-1, keepdims=True)                      # (TQ, 1)

    attn = lax.dot_general(p.astype(v.dtype), v,
                           (((1,), (0,)), ((), ())),
                           preferred_element_type=jnp.float32)  # (TQ, C) f32
    attn = attn * pl.reciprocal(l, approx=False)                # one recip / tile

    # out_proj directly into channels-major layout:
    #   out_cs[o, t] = sum_i Wo[o, i] * attn[t, i]   (NT dot_general)
    out_cs = lax.dot_general(
        wo_ref[...], attn.astype(wo_ref.dtype),
        (((1,), (1,)), ((), ())),
        preferred_element_type=jnp.float32)                     # (C, TQ)

    # bias + residual fused, single lane-dense f32 store per q tile
    o_ref[0] = (out_cs + bo_ref[...] + xres_ref[0]).astype(o_ref.dtype)


# ----------------------------------------------------------------------------
# Wrapper
# ----------------------------------------------------------------------------
def _pick_tile(total, target, multiple):
    """Largest tile <= target that divides `total` and is a multiple of
    `multiple`; falls back to the full extent if none exists."""
    if total <= target:
        return total
    t = (target // multiple) * multiple
    while t >= multiple:
        if total % t == 0:
            return t
        t -= multiple
    return total


def _vmem_limit_bytes():
    """~75% of this chip's physical VMEM (capped at 100 MB): v7x -> ~48 MB,
    v6e/v5e -> ~96 MB.  Leaves headroom for Mosaic internal scratch."""
    try:
        cap = pltpu.get_tpu_info().vmem_capacity_bytes
    except Exception:
        cap = 64 << 20
    return int(min(cap * 3 // 4, 100 << 20))


def vae_attention_block(x_nchw, params, *, tq=512, ts=1024):
    """x_nchw: (B, C, H, W) float32.  Returns (B, C, H, W)."""
    b, c, h, w = x_nchw.shape
    s = h * w
    x_bcs = x_nchw.reshape(b, c, s)          # free reshape - no transpose

    # kernel-1 spatial tile
    ts = _pick_tile(s, ts, 128)

    # kernel-2 q tile: keep the (tq, s) f32 score tile around <= 8 MB
    tq_cap = max(128, ((8 << 20) // (4 * s)) // 128 * 128)
    tq = _pick_tile(s, min(tq, tq_cap), 128)
    # v7x has 2 TensorCores/chip: keep b * nq >= 2 when it stays lane-aligned
    if b == 1 and tq == s and s % 256 == 0:
        tq = s // 2
    nq = s // tq
    assert s % ts == 0 and s % tq == 0

    w_qkv = params["w_qkv"]                  # (C, 3C) bf16 (Q slice pre-scaled)
    b_qkv = params["b_qkv"]                  # (1, 3C) f32
    wo = params["wo"]                        # (C, C)  bf16 (out, in)
    bo = params["bo"]                        # (C, 1)  f32

    vmem_limit = _vmem_limit_bytes()

    # ---- kernel 1: fused QKV projection ------------------------------------
    q, k, v = pl.pallas_call(
        _qkv_proj_kernel,
        out_shape=tuple(jax.ShapeDtypeStruct((b, s, c), jnp.bfloat16)
                        for _ in range(3)),
        grid_spec=pltpu.PrefetchScalarGridSpec(
            num_scalar_prefetch=0,
            grid=(b, s // ts),
            in_specs=[
                pl.BlockSpec((1, c, ts), lambda bi, si: (bi, 0, si)),   # x (C-major)
                pl.BlockSpec((c, 3 * c), lambda bi, si: (0, 0)),        # W_qkv
                pl.BlockSpec((1, 3 * c), lambda bi, si: (0, 0)),        # b_qkv
            ],
            out_specs=[pl.BlockSpec((1, ts, c), lambda bi, si: (bi, si, 0))] * 3,
        ),
        compiler_params=pltpu.CompilerParams(
            dimension_semantics=("parallel", "parallel"),
            vmem_limit_bytes=vmem_limit),
        cost_estimate=pl.CostEstimate(
            flops=2 * b * s * c * 3 * c,
            transcendentals=0,
            bytes_accessed=(b * s * c * 4            # x read (f32)
                            + 3 * b * s * c * 2      # q/k/v write (bf16)
                            + c * 3 * c * 2)),       # fused weight
    )(x_bcs, w_qkv, b_qkv)

    # ---- kernel 2: attention (K/V resident) + out_proj + residual ----------
    out_bcs = pl.pallas_call(
        _attn_kernel,
        out_shape=jax.ShapeDtypeStruct((b, c, s), x_nchw.dtype),
        grid_spec=pltpu.PrefetchScalarGridSpec(
            num_scalar_prefetch=0,
            grid=(b, nq),
            in_specs=[
                pl.BlockSpec((1, c, tq), lambda bi, qi: (bi, 0, qi)),   # residual
                pl.BlockSpec((1, tq, c), lambda bi, qi: (bi, qi, 0)),   # Q tile
                pl.BlockSpec((1, s, c), lambda bi, qi: (bi, 0, 0)),     # K (resident)
                pl.BlockSpec((1, s, c), lambda bi, qi: (bi, 0, 0)),     # V (resident)
                pl.BlockSpec((c, c), lambda bi, qi: (0, 0)),            # wo
                pl.BlockSpec((c, 1), lambda bi, qi: (0, 0)),            # bo
            ],
            out_specs=pl.BlockSpec((1, c, tq), lambda bi, qi: (bi, 0, qi)),
        ),
        compiler_params=pltpu.CompilerParams(
            dimension_semantics=("parallel", "parallel"),
            vmem_limit_bytes=vmem_limit),
        cost_estimate=pl.CostEstimate(
            flops=b * (4 * s * s * c + 2 * s * c * c),
            transcendentals=b * s * s,
            bytes_accessed=(2 * b * c * s * 4        # residual read + output write
                            + b * s * c * 2          # Q read
                            + 2 * b * s * c * 2      # K + V read once per batch
                            + c * c * 2 + c * 4)),   # out_proj params
    )(x_bcs, q, k, v, wo, bo)

    return out_bcs.reshape(b, c, h, w)


# ----------------------------------------------------------------------------
# Parameters (synthetic, PyTorch-Linear compatible)
# ----------------------------------------------------------------------------
def init_params(key, channels):
    """PyTorch Linear: weight (out, in), y = x @ W.T + b.
    The QKV weights are fused and stored transposed (in, 3*out) so kernel 1
    does a single TN dot_general; the 1/sqrt(d_head) softmax scale is folded
    into the Q slice of the fused weight and bias (n_heads=1 -> d_head=C).
    out_proj stays in (out, in) layout for the NT dot_general.  MXU operands
    are stored bf16, biases f32.
    """
    c = channels
    k1, k2, k3, k4 = jax.random.split(key, 4)
    bound = 1.0 / math.sqrt(c)
    w_in = jax.random.uniform(k1, (3 * c, c), jnp.float32, -bound, bound)
    b_in = jax.random.uniform(k2, (3 * c,), jnp.float32, -bound, bound)
    w_out = jax.random.uniform(k3, (c, c), jnp.float32, -bound, bound)
    b_out = jax.random.uniform(k4, (c,), jnp.float32, -bound, bound)

    scale = 1.0 / math.sqrt(c)
    w_fused = w_in.T                                   # (C, 3C) = [Wq | Wk | Wv]
    w_fused = w_fused.at[:, :c].multiply(scale)        # fold softmax scale into Q
    b_fused = b_in.at[:c].multiply(scale)

    return {
        "w_qkv": w_fused.astype(jnp.bfloat16),    # (C, 3C)
        "b_qkv": b_fused.reshape(1, 3 * c),       # (1, 3C)
        "wo": w_out.astype(jnp.bfloat16),         # (C, C)  (out, in)
        "bo": b_out.reshape(c, 1),                # (C, 1)
        # f32 copies (unscaled) for the pure-JAX reference check
        "_w_in": w_in, "_b_in": b_in, "_w_out": w_out, "_b_out": b_out,
    }


def _reference(x_nchw, params):
    """Pure-JAX f32 reference mirroring the PyTorch forward."""
    b, c, h, w = x_nchw.shape
    x = jnp.transpose(x_nchw.reshape(b, c, h * w), (0, 2, 1))    # (B, S, C)
    qkv = x @ params["_w_in"].T + params["_b_in"]
    q, k, v = jnp.split(qkv, 3, axis=-1)
    logits = (q @ jnp.swapaxes(k, -1, -2)) / math.sqrt(c)
    weight = jax.nn.softmax(logits, axis=-1)
    out = weight @ v
    out = out @ params["_w_out"].T + params["_b_out"]
    out = out + x
    return jnp.transpose(out, (0, 2, 1)).reshape(b, c, h, w)


if __name__ == "__main__":
    # GroupNorm(32, channels) in __init__ implies channels % 32 == 0 -> C=32.
    # TODO(synk): the reference forward never applies self.groupnorm, so it is
    # intentionally omitted here as well.
    # NOTE: this toy shape (C=32, S=64) is a correctness check only; real VAE
    # shapes (C=512, S=4096) are what the tiling defaults are sized for.
    B, C, H, W = 2, 32, 8, 8
    key = jax.random.PRNGKey(0)
    k_x, k_p = jax.random.split(key)
    x = jax.random.normal(k_x, (B, C, H, W), dtype=jnp.float32)
    params = init_params(k_p, C)

    out = jax.block_until_ready(vae_attention_block(x, params))
    ref = _reference(x, params)

    assert out.shape == (B, C, H, W)
    max_err = float(jnp.max(jnp.abs(out - ref)))
    # bf16 MXU operands vs f32 reference -> loosened tolerance
    assert max_err < 5e-2, f"mismatch vs reference: max abs err {max_err}"

    print("KERNEL_OK")
</pallas_src>

<mosaic_0001>
module attributes {stable_mosaic.version = 11 : i64} {
  func.func @_qkv_proj_kernel(%arg0: i32, %arg1: i32, %arg2: memref<1x32x64xf32, #tpu.memory_space<vmem>>, %arg3: memref<32x96xbf16, #tpu.memory_space<vmem>>, %arg4: memref<1x96xf32, #tpu.memory_space<vmem>>, %arg5: memref<1x64x32xbf16, #tpu.memory_space<vmem>>, %arg6: memref<1x64x32xbf16, #tpu.memory_space<vmem>>, %arg7: memref<1x64x32xbf16, #tpu.memory_space<vmem>>) attributes {dimension_semantics = [#tpu.dimension_semantics<parallel>, #tpu.dimension_semantics<parallel>], iteration_bounds = array<i64: 2, 1>, scalar_prefetch = 0 : i64, scratch_operands = 0 : i64, tpu.core_type = #tpu.core_type<tc>, window_params = [{transform_indices = @transform_0, window_bounds = array<i64: 1, 32, 64>}, {pipeline_mode = #tpu.pipeline_mode<synchronous>, transform_indices = @transform_1, window_bounds = array<i64: 32, 96>}, {pipeline_mode = #tpu.pipeline_mode<synchronous>, transform_indices = @transform_2, window_bounds = array<i64: 1, 96>}, {transform_indices = @transform_3, window_bounds = array<i64: 1, 64, 32>}, {transform_indices = @transform_4, window_bounds = array<i64: 1, 64, 32>}, {transform_indices = @transform_5, window_bounds = array<i64: 1, 64, 32>}]} {
    %c0 = arith.constant 0 : index
    %c0_0 = arith.constant 0 : index
    %c0_1 = arith.constant 0 : index
    %0 = vector.load %arg2[%c0, %c0_0, %c0_1] : memref<1x32x64xf32, #tpu.memory_space<vmem>>, vector<1x32x64xf32>
    %1 = vector.shape_cast %0 : vector<1x32x64xf32> to vector<32x64xf32>
    %2 = arith.truncf %1 : vector<32x64xf32> to vector<32x64xbf16>
    %c0_2 = arith.constant 0 : index
    %c0_3 = arith.constant 0 : index
    %3 = vector.load %arg3[%c0_2, %c0_3] : memref<32x96xbf16, #tpu.memory_space<vmem>>, vector<32x96xbf16>
    %cst = arith.constant dense<0.000000e+00> : vector<64x96xf32>
    %4 = tpu.matmul %2, %3, %cst {dimension_numbers = #tpu.dot_dimension_numbers<[0], [0], [1], [1], [0, 1, 1, 1], [], []>} : vector<32x64xbf16>, vector<32x96xbf16>, vector<64x96xf32> -> vector<64x96xf32>
    %c0_4 = arith.constant 0 : index
    %c0_5 = arith.constant 0 : index
    %5 = vector.load %arg4[%c0_4, %c0_5] : memref<1x96xf32, #tpu.memory_space<vmem>>, vector<1x96xf32>
    %6 = vector.broadcast %5 : vector<1x96xf32> to vector<64x96xf32>
    %7 = arith.addf %4, %6 : vector<64x96xf32>
    %8 = arith.truncf %7 : vector<64x96xf32> to vector<64x96xbf16>
    %9 = vector.extract_strided_slice %8 {offsets = [0, 0], sizes = [64, 32], strides = [1, 1]} : vector<64x96xbf16> to vector<64x32xbf16>
    %c0_6 = arith.constant 0 : index
    %c0_7 = arith.constant 0 : index
    %c0_8 = arith.constant 0 : index
    %10 = vector.load %arg5[%c0_6, %c0_7, %c0_8] : memref<1x64x32xbf16, #tpu.memory_space<vmem>>, vector<1x64x32xbf16>
    %11 = vector.shape_cast %10 : vector<1x64x32xbf16> to vector<64x32xbf16>
    %12 = vector.shape_cast %9 : vector<64x32xbf16> to vector<1x64x32xbf16>
    tpu.vector_store %arg5[%c0_6, %c0_7, %c0_8], %12 {strides = array<i32>} : memref<1x64x32xbf16, #tpu.memory_space<vmem>>, vector<1x64x32xbf16>,
    %13 = vector.extract_strided_slice %8 {offsets = [0, 32], sizes = [64, 32], strides = [1, 1]} : vector<64x96xbf16> to vector<64x32xbf16>
    %c0_9 = arith.constant 0 : index
    %c0_10 = arith.constant 0 : index
    %c0_11 = arith.constant 0 : index
    %14 = vector.load %arg6[%c0_9, %c0_10, %c0_11] : memref<1x64x32xbf16, #tpu.memory_space<vmem>>, vector<1x64x32xbf16>
    %15 = vector.shape_cast %14 : vector<1x64x32xbf16> to vector<64x32xbf16>
    %16 = vector.shape_cast %13 : vector<64x32xbf16> to vector<1x64x32xbf16>
    tpu.vector_store %arg6[%c0_9, %c0_10, %c0_11], %16 {strides = array<i32>} : memref<1x64x32xbf16, #tpu.memory_space<vmem>>, vector<1x64x32xbf16>,
    %17 = vector.extract_strided_slice %8 {offsets = [0, 64], sizes = [64, 32], strides = [1, 1]} : vector<64x96xbf16> to vector<64x32xbf16>
    %c0_12 = arith.constant 0 : index
    %c0_13 = arith.constant 0 : index
    %c0_14 = arith.constant 0 : index
    %18 = vector.load %arg7[%c0_12, %c0_13, %c0_14] : memref<1x64x32xbf16, #tpu.memory_space<vmem>>, vector<1x64x32xbf16>
    %19 = vector.shape_cast %18 : vector<1x64x32xbf16> to vector<64x32xbf16>
    %20 = vector.shape_cast %17 : vector<64x32xbf16> to vector<1x64x32xbf16>
    tpu.vector_store %arg7[%c0_12, %c0_13, %c0_14], %20 {strides = array<i32>} : memref<1x64x32xbf16, #tpu.memory_space<vmem>>, vector<1x64x32xbf16>,
    return
  }
  func.func @transform_0(%arg0: i32, %arg1: i32) -> (i32, i32, i32) {
    %c0_i32 = arith.constant 0 : i32
    %c0_i32_0 = arith.constant 0 : i32
    return %arg0, %c0_i32, %arg1 : i32, i32, i32
  }
  func.func @transform_1(%arg0: i32, %arg1: i32) -> (i32, i32) {
    %c0_i32 = arith.constant 0 : i32
    %c0_i32_0 = arith.constant 0 : i32
    %c0_i32_1 = arith.constant 0 : i32
    return %c0_i32, %c0_i32_0 : i32, i32
  }
  func.func @transform_2(%arg0: i32, %arg1: i32) -> (i32, i32) {
    %c0_i32 = arith.constant 0 : i32
    %c0_i32_0 = arith.constant 0 : i32
    %c0_i32_1 = arith.constant 0 : i32
    return %c0_i32, %c0_i32_0 : i32, i32
  }
  func.func @transform_3(%arg0: i32, %arg1: i32) -> (i32, i32, i32) {
    %c0_i32 = arith.constant 0 : i32
    %c0_i32_0 = arith.constant 0 : i32
    return %arg0, %arg1, %c0_i32 : i32, i32, i32
  }
  func.func @transform_4(%arg0: i32, %arg1: i32) -> (i32, i32, i32) {
    %c0_i32 = arith.constant 0 : i32
    %c0_i32_0 = arith.constant 0 : i32
    return %arg0, %arg1, %c0_i32 : i32, i32, i32
  }
  func.func @transform_5(%arg0: i32, %arg1: i32) -> (i32, i32, i32) {
    %c0_i32 = arith.constant 0 : i32
    %c0_i32_0 = arith.constant 0 : i32
    return %arg0, %arg1, %c0_i32 : i32, i32, i32
  }
}

</mosaic_0001>

<llo_original>
// kernel: tpu_custom_call.1
$region0: #{tpu_custom_call.1}
  #allocation0 [shape = 'u32[]', space=smem, size = 0x4, offset = 0x4, fixed_abs, tag = 'smem constant byte address 0x4 - core index']
  #allocation1 [shape = 'u32[144,128]{1,0:T(1,128)}', space=vmem, size = 0x12000, scoped, tag = 'internal scratch']
  %s0 = inlined_call_operand.hbm [shape: f32[2,32,64], index: 0, kind: input, shape index: {}]
  %s1 = inlined_call_operand.hbm [shape: bf16[32,96], index: 1, kind: input, shape index: {}]
  %s2 = inlined_call_operand.vmem [shape: f32[1,96], index: 2, kind: input, shape index: {}]
  %s3 = inlined_call_operand.vmem [shape: bf16[2,64,32], index: 3, kind: output, shape index: {0}]
  %s4 = inlined_call_operand.vmem [shape: bf16[2,64,32], index: 4, kind: output, shape index: {1}]
  %s5 = inlined_call_operand.vmem [shape: bf16[2,64,32], index: 5, kind: output, shape index: {2}]
  %6 = xla_tuple %s3, %s4, %s5
  %s7 = sld [smem:[#allocation0]]
  $region69: #{tpu_custom_call.1} parent=0
    _
  %s9 = ssub.s32 1, %s7
  %s10 = scalar_select 0, %s9, %s7
  $region1: #{tpu_custom_call.1} parent=0
    #allocation2 [shape = 'u8[32768]{0}', space=vmem, size = 0x8000, scoped, tag = 'input window, operand 0']
    #allocation3 [shape = 's32[2]{0}', space=sflag, size = 0x8, scoped, tag = 'scoped memory for tpu_custom_call.1']
    #allocation4 [shape = 'u8[8192]{0}', space=vmem, size = 0x2000, scoped, tag = 'input window, operand 1, single buffered']
    #allocation5 [shape = 's32[1]{0}', space=sflag, size = 0x4, scoped, tag = 'scoped memory for tpu_custom_call.1']
    %11 = vsyncpa [#allocation3], 0
    %s12 = scalar_lea.sflag [#allocation3], 1
    %13 = vsyncpa %s12, 0
    %14 = vsyncpa [#allocation5], 0
    loop: start=0, step=1, limit=4
    $region2: #{tpu_custom_call.1} parent=1 // loop_pre_header
      _
    $region3: #{tpu_custom_call.1} parent=1 // loop_header
      %s16 = sphi 0, %s20
      %p17 = scmp.ge.s32.totalorder %s16, 4
      %s23 = sphi 0, %s35
      %s24 = sphi 0, %s31
      %s25 = sphi 0, %s23
      %s26 = sphi 0, %s24
      %s27 = sphi 0, %s25
      %s28 = sphi 0, %s26
      %s40 = sphi 0, %s42
      %s43 = sphi 0, %s40
      %s44 = sphi 0, %s43
      %s60 = sphi 0, %s44
      %s64 = sphi 0, %s64
      %s66 = sphi 0, %s64
      %s67 = sphi 0, %s66
      %s81 = sphi 0, %s67
      %s85 = sphi 0, %s85
      %s87 = sphi 0, %s85
      %s88 = sphi 0, %s87
      %s102 = sphi 0, %s88
      %s110 = sphi 0, %s112
      %s113 = sphi 0, %s110
      %s114 = sphi 0, %s113
      %s130 = sphi 0, %s114
      %s138 = sphi 0, %s140
      %s141 = sphi 0, %s138
      %s142 = sphi 0, %s141
      %s158 = sphi 0, %s142
      %s166 = sphi 0, %s168
      %s169 = sphi 0, %s166
      %s170 = sphi 0, %s169
      %s186 = sphi 0, %s170
    $region4: #{tpu_custom_call.1} parent=1 // loop_header_branch
      %19 = sbr.rel (%p17) target = $region8
    $region5: #{tpu_custom_call.1} parent=1 // loop_body
      %s21 = ssub.s32 %s16, 1
      %s22 = ssub.s32 %s16, 2
      %s29 = sadd.s32 1, %s24
      %p30 = scmp.ge.s32.totalorder %s29, 1
      %s31 = scalar_select %p30, 0, %s29
      %s32 = sadd.s32 1, %s23
      %s33 = scalar_select %p30, %s32, %s23
      %p34 = scmp.ge.s32.totalorder %s33, 2
      %s35 = scalar_select %p34, 0, %s33
      %s36 = ssub.s32 %s23, %s35
      %s37 = ssub.s32 %s24, %s31
      %s38 = sor.u32 %s36, %s37
      %p39 = scmp.eq.s32.totalorder %s38, 0
      %s41 = sadd.s32 %s40, 1
      %s42 = scalar_select %p39, %s40, %s41
      %p45 = pneg %p39
      %p46 = scmp.eq.s32.totalorder %s16, 1
      %p47 = por %p45, %p46
      %p48 = scmp.ne.s32.totalorder %s40, %s43
      %p49 = scmp.eq.s32.totalorder %s16, 0
      %p50 = por %p48, %p49
      %p51 = scmp.ne.s32.totalorder %s40, %s43
      %p52 = scmp.eq.s32.totalorder %s21, 1
      %p53 = por %p51, %p52
      %p54 = scmp.ne.s32.totalorder %s43, %s44
      %p55 = scmp.eq.s32.totalorder %s21, 0
      %p56 = por %p54, %p55
      %p57 = scmp.ne.s32.totalorder %s43, %s44
      %p58 = scmp.eq.s32.totalorder %s22, 1
      %p59 = por %p57, %p58
      %p61 = scmp.ne.s32.totalorder %s44, %s60
      %p62 = scmp.eq.s32.totalorder %s22, 0
      %p63 = por %p61, %p62
      %s65 = sadd.s32 %s64, 1
      %p68 = scmp.eq.s32.totalorder %s16, 1
      %p69 = scmp.ne.s32.totalorder %s64, %s66
      %p70 = scmp.eq.s32.totalorder %s16, 0
      %p71 = por %p69, %p70
      %p72 = scmp.ne.s32.totalorder %s64, %s66
      %p73 = scmp.eq.s32.totalorder %s21, 1
      %p74 = por %p72, %p73
      %p75 = scmp.ne.s32.totalorder %s66, %s67
      %p76 = scmp.eq.s32.totalorder %s21, 0
      %p77 = por %p75, %p76
      %p78 = scmp.ne.s32.totalorder %s66, %s67
      %p79 = scmp.eq.s32.totalorder %s22, 1
      %p80 = por %p78, %p79
      %p82 = scmp.ne.s32.totalorder %s67, %s81
      %p83 = scmp.eq.s32.totalorder %s22, 0
      %p84 = por %p82, %p83
      %s86 = sadd.s32 %s85, 1
      %p89 = scmp.eq.s32.totalorder %s16, 1
      %p90 = scmp.ne.s32.totalorder %s85, %s87
      %p91 = scmp.eq.s32.totalorder %s16, 0
      %p92 = por %p90, %p91
      %p93 = scmp.ne.s32.totalorder %s85, %s87
      %p94 = scmp.eq.s32.totalorder %s21, 1
      %p95 = por %p93, %p94
      %p96 = scmp.ne.s32.totalorder %s87, %s88
      %p97 = scmp.eq.s32.totalorder %s21, 0
      %p98 = por %p96, %p97
      %p99 = scmp.ne.s32.totalorder %s87, %s88
      %p100 = scmp.eq.s32.totalorder %s22, 1
      %p101 = por %p99, %p100
      %p103 = scmp.ne.s32.totalorder %s88, %s102
      %p104 = scmp.eq.s32.totalorder %s22, 0
      %p105 = por %p103, %p104
      %s106 = ssub.s32 %s23, %s35
      %s107 = ssub.s32 %s24, %s31
      %s108 = sor.u32 %s106, %s107
      %p109 = scmp.eq.s32.totalorder %s108, 0
      %s111 = sadd.s32 %s110, 1
      %s112 = scalar_select %p109, %s110, %s111
      %p115 = pneg %p109
      %p116 = scmp.eq.s32.totalorder %s16, 1
      %p117 = por %p115, %p116
      %p118 = scmp.ne.s32.totalorder %s110, %s113
      %p119 = scmp.eq.s32.totalorder %s16, 0
      %p120 = por %p118, %p119
      %p121 = scmp.ne.s32.totalorder %s110, %s113
      %p122 = scmp.eq.s32.totalorder %s21, 1
      %p123 = por %p121, %p122
      %p124 = scmp.ne.s32.totalorder %s113, %s114
      %p125 = scmp.eq.s32.totalorder %s21, 0
      %p126 = por %p124, %p125
      %p127 = scmp.ne.s32.totalorder %s113, %s114
      %p128 = scmp.eq.s32.totalorder %s22, 1
      %p129 = por %p127, %p128
      %p131 = scmp.ne.s32.totalorder %s114, %s130
      %p132 = scmp.eq.s32.totalorder %s22, 0
      %p133 = por %p131, %p132
      %s134 = ssub.s32 %s23, %s35
      %s135 = ssub.s32 %s24, %s31
      %s136 = sor.u32 %s134, %s135
      %p137 = scmp.eq.s32.totalorder %s136, 0
      %s139 = sadd.s32 %s138, 1
      %s140 = scalar_select %p137, %s138, %s139
      %p143 = pneg %p137
      %p144 = scmp.eq.s32.totalorder %s16, 1
      %p145 = por %p143, %p144
      %p146 = scmp.ne.s32.totalorder %s138, %s141
      %p147 = scmp.eq.s32.totalorder %s16, 0
      %p148 = por %p146, %p147
      %p149 = scmp.ne.s32.totalorder %s138, %s141
      %p150 = scmp.eq.s32.totalorder %s21, 1
      %p151 = por %p149, %p150
      %p152 = scmp.ne.s32.totalorder %s141, %s142
      %p153 = scmp.eq.s32.totalorder %s21, 0
      %p154 = por %p152, %p153
      %p155 = scmp.ne.s32.totalorder %s141, %s142
      %p156 = scmp.eq.s32.totalorder %s22, 1
      %p157 = por %p155, %p156
      %p159 = scmp.ne.s32.totalorder %s142, %s158
      %p160 = scmp.eq.s32.totalorder %s22, 0
      %p161 = por %p159, %p160
      %s162 = ssub.s32 %s23, %s35
      %s163 = ssub.s32 %s24, %s31
      %s164 = sor.u32 %s162, %s163
      %p165 = scmp.eq.s32.totalorder %s164, 0
      %s167 = sadd.s32 %s166, 1
      %s168 = scalar_select %p165, %s166, %s167
      %p171 = pneg %p165
      %p172 = scmp.eq.s32.totalorder %s16, 1
      %p173 = por %p171, %p172
      %p174 = scmp.ne.s32.totalorder %s166, %s169
      %p175 = scmp.eq.s32.totalorder %s16, 0
      %p176 = por %p174, %p175
      %p177 = scmp.ne.s32.totalorder %s166, %s169
      %p178 = scmp.eq.s32.totalorder %s21, 1
      %p179 = por %p177, %p178
      %p180 = scmp.ne.s32.totalorder %s169, %s170
      %p181 = scmp.eq.s32.totalorder %s21, 0
      %p182 = por %p180, %p181
      %p183 = scmp.ne.s32.totalorder %s169, %s170
      %p184 = scmp.eq.s32.totalorder %s22, 1
      %p185 = por %p183, %p184
      %p187 = scmp.ne.s32.totalorder %s170, %s186
      %p188 = scmp.eq.s32.totalorder %s22, 0
      %p189 = por %p187, %p188
      %p190 = scmp.le.s32.totalorder 1, %s16
      %p191 = scmp.lt.s32.totalorder %s16, 3
      %p192 = pnand %p190, %p191
      %p193 = pneg %p192
      // Predicated region
      $region9: #{tpu_custom_call.1} parent=5 // pred_check
        _
      $region10: #{tpu_custom_call.1} parent=5 // pred_check_branch
        %195 = sbr.rel (%p192) target = $region12
      $region11: #{tpu_custom_call.1} parent=5 // pred_region
        %s196 = ssub.s32 %s16, 1
        // Predicated region
        $region13: #{tpu_custom_call.1} parent=11 // pred_check
          %p197 = pneg %p77
        $region14: #{tpu_custom_call.1} parent=11 // pred_check_branch
          %199 = sbr.rel (%p197) target = $region16
        $region15: #{tpu_custom_call.1} parent=11 // pred_region
          %s201 = ssub.s32 256, 256
          %202 = vsyncadd [#allocation5], %s201
          %s203 = sshll.u32 [#allocation4], 4
          %s204 = int_to_ptr.vmem [resolvable:$true] %s203
          %209 = dma.hbm_to_vmem [thread:$0]  %s1, 256, %s204, [#allocation5], 64, 64, 4
        $region16: #{tpu_custom_call.1} parent=11 // pred_fallthru
          _
        // Predicated region
        $region17: #{tpu_custom_call.1} parent=11 // pred_check
          %p210 = pneg %p98
        $region18: #{tpu_custom_call.1} parent=11 // pred_check_branch
          %212 = sbr.rel (%p210) target = $region20
        $region19: #{tpu_custom_call.1} parent=11 // pred_region
          _
        $region20: #{tpu_custom_call.1} parent=11 // pred_fallthru
          _
      $region12: #{tpu_custom_call.1} parent=5 // pred_fallthru
        _
      %p213 = scmp.lt.s32.totalorder %s16, 2
      // Predicated region
      $region21: #{tpu_custom_call.1} parent=5 // pred_check
        %p214 = pneg %p213
      $region22: #{tpu_custom_call.1} parent=5 // pred_check_branch
        %216 = sbr.rel (%p214) target = $region24
      $region23: #{tpu_custom_call.1} parent=5 // pred_region
        // Predicated region
        $region25: #{tpu_custom_call.1} parent=23 // pred_check
          %p217 = pneg %p50
        $region26: #{tpu_custom_call.1} parent=23 // pred_check_branch
          %219 = sbr.rel (%p217) target = $region28
        $region27: #{tpu_custom_call.1} parent=23 // pred_region
          %s220 = sand.u32 %s40, 1
          %s221 = scalar_lea.sflag [#allocation3], %s220
          %s222 = sand.u32 %s40, 1
          %s223 = smul.addr %s222, 32
          %s224 = scalar_lea.vmem [#allocation2], %s223
          %s226 = ssub.s32 512, 512
          %227 = vsyncadd %s221, %s226
          %s228 = smul.addr %s23, 4
          %s229 = sadd.s32 %s24, %s228
          %s230 = smul.addr %s229, 128
          %s231 = scalar_lea.hbm %s0, %s230
          %s232 = sshll.u32 %s224, 4
          %s233 = int_to_ptr.vmem [resolvable:$true] %s232
          %238 = dma.hbm_to_vmem [thread:$0]  %s231, 512, %s233, %s221, 128, 128, 8
        $region28: #{tpu_custom_call.1} parent=23 // pred_fallthru
          _
      $region24: #{tpu_custom_call.1} parent=5 // pred_fallthru
        _
      %p239 = scmp.le.s32.totalorder 1, %s16
      %p240 = scmp.lt.s32.totalorder %s16, 3
      %p241 = pnand %p239, %p240
      %p242 = pneg %p241
      // Predicated region
      $region29: #{tpu_custom_call.1} parent=5 // pred_check
        _
      $region30: #{tpu_custom_call.1} parent=5 // pred_check_branch
        %244 = sbr.rel (%p241) target = $region32
      $region31: #{tpu_custom_call.1} parent=5 // pred_region
        %s245 = ssub.s32 %s16, 1
        %s246 = sand.u32 %s43, 1
        %s247 = scalar_lea.sflag [#allocation3], %s246
        %s248 = sand.u32 %s43, 1
        %s249 = smul.addr %s248, 32
        %s250 = scalar_lea.vmem [#allocation2], %s249
        // Predicated region
        $region33: #{tpu_custom_call.1} parent=31 // pred_check
          %p251 = pneg %p56
        $region34: #{tpu_custom_call.1} parent=31 // pred_check_branch
          %253 = sbr.rel (%p251) target = $region36
        $region35: #{tpu_custom_call.1} parent=31 // pred_region
          %254 = dma.done %s247, 512
        $region36: #{tpu_custom_call.1} parent=31 // pred_fallthru
          _
        // Predicated region
        $region37: #{tpu_custom_call.1} parent=31 // pred_check
          %p255 = pneg %p77
        $region38: #{tpu_custom_call.1} parent=31 // pred_check_branch
          %257 = sbr.rel (%p255) target = $region40
        $region39: #{tpu_custom_call.1} parent=31 // pred_region
          %258 = dma.done [#allocation5], 256
        $region40: #{tpu_custom_call.1} parent=31 // pred_fallthru
          _
        %s259 = sand.u32 %s43, 1
        %s260 = scalar_lea.sflag [#allocation3], %s259
        %s261 = sand.u32 %s43, 1
        %s262 = smul.addr %s261, 32
        %s263 = scalar_lea.vmem [#allocation2], %s262
        %p264 = pneg %p56
        %p265 = pneg %p53
        %p266 = pneg %p77
        %p267 = pneg %p74
        %p268 = pneg %p98
        %p269 = pneg %p95
        %p270 = pneg %p126
        %p271 = pneg %p123
        %s272 = smul.u32 8, %s26
        %p273 = scmp.lt.s32.totalorder %s25, 1
        %s274 = scalar_select %p273, %s25, 1
        %p275 = scmp.lt.s32.totalorder %s272, 7
        %s276 = scalar_select %p275, %s272, 7
        %s277 = smul.addr %s274, 8
        %s278 = sadd.s32 %s276, %s277
        %s279 = smul.addr %s278, 4
        %s280 = scalar_lea.vmem %s3, %s279
        %p281 = pneg %p154
        %p282 = pneg %p151
        %s283 = smul.u32 8, %s26
        %p284 = scmp.lt.s32.totalorder %s25, 1
        %s285 = scalar_select %p284, %s25, 1
        %p286 = scmp.lt.s32.totalorder %s283, 7
        %s287 = scalar_select %p286, %s283, 7
        %s288 = smul.addr %s285, 8
        %s289 = sadd.s32 %s287, %s288
        %s290 = smul.addr %s289, 4
        %s291 = scalar_lea.vmem %s4, %s290
        %p292 = pneg %p182
        %p293 = pneg %p179
        %s294 = smul.u32 8, %s26
        %p295 = scmp.lt.s32.totalorder %s25, 1
        %s296 = scalar_select %p295, %s25, 1
        %p297 = scmp.lt.s32.totalorder %s294, 7
        %s298 = scalar_select %p297, %s294, 7
        %s299 = smul.addr %s296, 8
        %s300 = sadd.s32 %s298, %s299
        %s301 = smul.addr %s300, 4
        %s302 = scalar_lea.vmem %s5, %s301
        %s303 = smul.u32 8, %s26
        %p304 = scmp.lt.s32.totalorder %s25, 1
        %s305 = scalar_select %p304, %s25, 1
        %p306 = scmp.lt.s32.totalorder %s303, 7
        %s307 = scalar_select %p306, %s303, 7
        %s308 = smul.addr %s305, 8
        %s309 = sadd.s32 %s307, %s308
        %s310 = smul.addr %s309, 4
        %s311 = scalar_lea.vmem %s3, %s310
        %s312 = smul.u32 8, %s26
        %s313 = smul.u32 8, %s26
        %p314 = scmp.lt.s32.totalorder %s25, 1
        %s315 = scalar_select %p314, %s25, 1
        %p316 = scmp.lt.s32.totalorder %s313, 7
        %s317 = scalar_select %p316, %s313, 7
        %s318 = smul.addr %s315, 8
        %s319 = sadd.s32 %s317, %s318
        %s320 = smul.addr %s319, 4
        %s321 = scalar_lea.vmem %s4, %s320
        %s322 = smul.u32 8, %s26
        %s323 = smul.u32 8, %s26
        %p324 = scmp.lt.s32.totalorder %s25, 1
        %s325 = scalar_select %p324, %s25, 1
        %p326 = scmp.lt.s32.totalorder %s323, 7
        %s327 = scalar_select %p326, %s323, 7
        %s328 = smul.addr %s325, 8
        %s329 = sadd.s32 %s327, %s328
        %s330 = smul.addr %s329, 4
        %s331 = scalar_lea.vmem %s5, %s330
        %s332 = smul.u32 8, %s26
        %v334 = vld [vmem:[%s250] sm:$0xff]
        %v335 = vld [vmem:[%s250 + $0x8] sm:$0xff]
        %v336 = vld [vmem:[%s250 + $0x10] sm:$0xff]
        %v337 = vld [vmem:[%s250 + $0x18] sm:$0xff]
        %v338 = vpack.c.bf16 %v335, %v334
        %v339 = vpack.c.bf16 %v337, %v336
        %v340 = vld [vmem:[#allocation4] sm:$0xf]
        %v341 = vld [vmem:[#allocation4 + $0x4] sm:$0xf]
        %v342 = vld [vmem:[#allocation4 + $0x8] sm:$0xf]
        %v343 = vld [vmem:[#allocation4 + $0xc] sm:$0xf]
        %v344 = vld [vmem:[%s2] sm:$0x1]
        %v346 = vlaneseq
        %v347 = vshrl.u32 %v346, 7
        %v348 = vsub.s32 0, %v347
        %v349 = vrot.slane %v344, %v348
        %351 = vxpose.xlu0.c.b16.start [1/8] %v338, 128
        %352 = vxpose.xlu0.c.b16.cont [2/8] %v339, 128
        %353 = vxpose.xlu0.c.b16.cont [3/8] 0, 128
        %354 = vxpose.xlu0.c.b16.cont [4/8] 0, 128
        %355 = vxpose.xlu0.c.b16.cont [5/8] 0, 128
        %356 = vxpose.xlu0.c.b16.cont [6/8] 0, 128
        %357 = vxpose.xlu0.c.b16.cont [7/8] 0, 128
        %358 = vxpose.xlu0.c.b16.end [8/8] 0, 128
        %v359 = vpop.trf.xlu0
        %v360 = vpop.trf.xlu0
        %v361 = vpop.trf.xlu0
        %v362 = vpop.trf.xlu0
        %v363 = vpop.trf.xlu0
        %v364 = vpop.trf.xlu0
        %v365 = vpop.trf.xlu0
        %v366 = vpop.trf.xlu0
        %v371 = vunpack.c.l.b16 %v340
        %v372 = vunpack.c.l.b16 %v341
        %v373 = vunpack.c.l.b16 %v342
        %v374 = vunpack.c.l.b16 %v343
        %v375 = vpack.c.b16 %v372, %v371
        %v376 = vpack.c.b16 %v374, %v373
        %vm379 = vcmask 261120
        %v381 = vsel %vm379, %v359, 0
        %v384 = vsel %vm379, %v360, 0
        %v387 = vsel %vm379, %v361, 0
        %v390 = vsel %vm379, %v362, 0
        %392 = vmatprep.subr.bf16.mxu0 0
        %393 = vmatpush1.bf16.msra.mxu0 %v375
        %394 = vmatprep.subr.bf16.mxu0 0
        %395 = vmatpush1.bf16.msra.mxu0 %v376
        %396 = vmatprep.subr.bf16.mxu0 0
        %397 = vmatpush1.bf16.msra.mxu0 0
        %398 = vmatprep.subr.bf16.mxu0 0
        %399 = vmatpush1.bf16.msra.mxu0 0
        %400 = vmatprep.subr.bf16.mxu0 0
        %401 = vmatpush1.bf16.msra.mxu0 0
        %402 = vmatprep.subr.bf16.mxu0 0
        %403 = vmatpush1.bf16.msra.mxu0 0
        %404 = vmatprep.subr.bf16.mxu0 0
        %405 = vmatpush1.bf16.msra.mxu0 0
        %406 = vmatprep.subr.bf16.mxu0 0
        %407 = vmatpush1.bf16.msra.mxu0 0
        %408 = vmatprep.subr.bf16.mxu0 0
        %409 = vmatpush1.bf16.msra.mxu0 0
        %410 = vmatprep.subr.bf16.mxu0 0
        %411 = vmatpush1.bf16.msra.mxu0 0
        %412 = vmatprep.subr.bf16.mxu0 0
        %413 = vmatpush1.bf16.msra.mxu0 0
        %414 = vmatprep.subr.bf16.mxu0 0
        %415 = vmatpush1.bf16.msra.mxu0 0
        %416 = vmatprep.subr.bf16.mxu0 0
        %417 = vmatpush1.bf16.msra.mxu0 0
        %418 = vmatprep.subr.bf16.mxu0 0
        %419 = vmatpush1.bf16.msra.mxu0 0
        %420 = vmatprep.subr.bf16.mxu0 0
        %421 = vmatpush1.bf16.msra.mxu0 0
        %422 = vmatprep.subr.bf16.mxu0 0
        %423 = vmatpush1.bf16.msra.mxu0 0
        %424 = vmatprep.mubr.bf16.mxu0 0
        %425 = vmatmul.mubr.bf16.gmra.mrb[0].mxu0 %v381
        %v426 = vpop.f32.mrb[0].mxu0
        %v427 = vadd.f32 %v349, %v426
        %v428 = vpop.f32.mrb[0].mxu0
        %v429 = vpop.f32.mrb[0].mxu0
        %v430 = vadd.f32 %v349, %v429
        %v431 = vpop.f32.mrb[0].mxu0
        %432 = vmatprep.mubr.bf16.mxu0 0
        %433 = vmatmul.mubr.bf16.gmra.mrb[0].mxu0 %v384
        %v434 = vpop.f32.mrb[0].mxu0
        %v435 = vadd.f32 %v349, %v434
        %v436 = vpop.f32.mrb[0].mxu0
        %v437 = vpop.f32.mrb[0].mxu0
        %v438 = vadd.f32 %v349, %v437
        %v439 = vpop.f32.mrb[0].mxu0
        %440 = vmatprep.mubr.bf16.mxu0 0
        %441 = vmatmul.mubr.bf16.gmra.mrb[0].mxu0 %v387
        %v442 = vpop.f32.mrb[0].mxu0
        %v443 = vadd.f32 %v349, %v442
        %v444 = vpop.f32.mrb[0].mxu0
        %v445 = vpop.f32.mrb[0].mxu0
        %v446 = vadd.f32 %v349, %v445
        %v447 = vpop.f32.mrb[0].mxu0
        %448 = vmatprep.mubr.bf16.mxu0 0
        %449 = vmatmul.mubr.bf16.gmra.mrb[0].mxu0 %v390
        %v450 = vpop.f32.mrb[0].mxu0
        %v451 = vadd.f32 %v349, %v450
        %v452 = vpop.f32.mrb[0].mxu0
        %v453 = vpop.f32.mrb[0].mxu0
        %v454 = vadd.f32 %v349, %v453
        %v455 = vpop.f32.mrb[0].mxu0
        %456 = vdwg.mxu0
        %v457 = vpack.c.bf16 %v430, %v427
        %v458 = vpack.c.bf16 %v438, %v435
        %v459 = vpack.c.bf16 %v446, %v443
        %v460 = vpack.c.bf16 %v454, %v451
        %v465 = vunpack.c.l.b16 %v457
        %v466 = vunpack.c.h.b16 %v457
        %v467 = vunpack.c.l.b16 %v458
        %v468 = vunpack.c.h.b16 %v458
        %v469 = vunpack.c.l.b16 %v459
        %v470 = vunpack.c.h.b16 %v459
        %v471 = vunpack.c.l.b16 %v460
        %v472 = vunpack.c.h.b16 %v460
        %v473 = vpack.c.b16 %v465, %v465
        %v474 = vpack.c.b16 %v466, %v466
        %v475 = vpack.c.b16 %v467, %v467
        %v476 = vpack.c.b16 %v468, %v468
        %v477 = vpack.c.b16 %v469, %v469
        %v478 = vpack.c.b16 %v470, %v470
        %v479 = vpack.c.b16 %v471, %v471
        %v480 = vpack.c.b16 %v472, %v472
        %vm489 = vcmask 257024
        %490 = vst.msk [vmem:[%s311] sm:$0xf] %vm489, %v473
        %491 = vst.msk [vmem:[%s311 + $0x4] sm:$0xf] %vm489, %v474
        %492 = vst.msk [vmem:[%s311 + $0x8] sm:$0xf] %vm489, %v475
        %493 = vst.msk [vmem:[%s311 + $0xc] sm:$0xf] %vm489, %v476
        %494 = vst.msk [vmem:[%s311 + $0x10] sm:$0xf] %vm489, %v477
        %495 = vst.msk [vmem:[%s311 + $0x14] sm:$0xf] %vm489, %v478
        %496 = vst.msk [vmem:[%s311 + $0x18] sm:$0xf] %vm489, %v479
        %497 = vst.msk [vmem:[%s311 + $0x1c] sm:$0xf] %vm489, %v480
        %498 = vrot.lane.b32.xlu0 %v473, 96
        %v499 = vpop.permute.xlu0 %498
        %500 = vrot.lane.b32.xlu0 %v474, 96
        %v501 = vpop.permute.xlu0 %500
        %502 = vrot.lane.b32.xlu0 %v475, 96
        %v503 = vpop.permute.xlu0 %502
        %504 = vrot.lane.b32.xlu0 %v476, 96
        %v505 = vpop.permute.xlu0 %504
        %506 = vrot.lane.b32.xlu0 %v477, 96
        %v507 = vpop.permute.xlu0 %506
        %508 = vrot.lane.b32.xlu0 %v478, 96
        %v509 = vpop.permute.xlu0 %508
        %510 = vrot.lane.b32.xlu0 %v479, 96
        %v511 = vpop.permute.xlu0 %510
        %512 = vrot.lane.b32.xlu0 %v480, 96
        %v513 = vpop.permute.xlu0 %512
        %522 = vst.msk [vmem:[%s321] sm:$0xf] %vm489, %v499
        %523 = vst.msk [vmem:[%s321 + $0x4] sm:$0xf] %vm489, %v501
        %524 = vst.msk [vmem:[%s321 + $0x8] sm:$0xf] %vm489, %v503
        %525 = vst.msk [vmem:[%s321 + $0xc] sm:$0xf] %vm489, %v505
        %526 = vst.msk [vmem:[%s321 + $0x10] sm:$0xf] %vm489, %v507
        %527 = vst.msk [vmem:[%s321 + $0x14] sm:$0xf] %vm489, %v509
        %528 = vst.msk [vmem:[%s321 + $0x18] sm:$0xf] %vm489, %v511
        %529 = vst.msk [vmem:[%s321 + $0x1c] sm:$0xf] %vm489, %v513
        %530 = vrot.lane.b32.xlu0 %v473, 64
        %v531 = vpop.permute.xlu0 %530
        %532 = vrot.lane.b32.xlu0 %v474, 64
        %v533 = vpop.permute.xlu0 %532
        %534 = vrot.lane.b32.xlu0 %v475, 64
        %v535 = vpop.permute.xlu0 %534
        %536 = vrot.lane.b32.xlu0 %v476, 64
        %v537 = vpop.permute.xlu0 %536
        %538 = vrot.lane.b32.xlu0 %v477, 64
        %v539 = vpop.permute.xlu0 %538
        %540 = vrot.lane.b32.xlu0 %v478, 64
        %v541 = vpop.permute.xlu0 %540
        %542 = vrot.lane.b32.xlu0 %v479, 64
        %v543 = vpop.permute.xlu0 %542
        %544 = vrot.lane.b32.xlu0 %v480, 64
        %v545 = vpop.permute.xlu0 %544
        %554 = vst.msk [vmem:[%s331] sm:$0xf] %vm489, %v531
        %555 = vst.msk [vmem:[%s331 + $0x4] sm:$0xf] %vm489, %v533
        %556 = vst.msk [vmem:[%s331 + $0x8] sm:$0xf] %vm489, %v535
        %557 = vst.msk [vmem:[%s331 + $0xc] sm:$0xf] %vm489, %v537
        %558 = vst.msk [vmem:[%s331 + $0x10] sm:$0xf] %vm489, %v539
        %559 = vst.msk [vmem:[%s331 + $0x14] sm:$0xf] %vm489, %v541
        %560 = vst.msk [vmem:[%s331 + $0x18] sm:$0xf] %vm489, %v543
        %561 = vst.msk [vmem:[%s331 + $0x1c] sm:$0xf] %vm489, %v545
        %s562 = smul.u32 8, %s26
        %p563 = scmp.lt.s32.totalorder %s25, 1
        %s564 = scalar_select %p563, %s25, 1
        %p565 = scmp.lt.s32.totalorder %s562, 7
        %s566 = scalar_select %p565, %s562, 7
        %s567 = smul.addr %s564, 8
        %s568 = sadd.s32 %s566, %s567
        %s569 = smul.addr %s568, 4
        %s570 = scalar_lea.vmem %s3, %s569
        %s571 = smul.u32 8, %s26
        %p572 = scmp.lt.s32.totalorder %s25, 1
        %s573 = scalar_select %p572, %s25, 1
        %p574 = scmp.lt.s32.totalorder %s571, 7
        %s575 = scalar_select %p574, %s571, 7
        %s576 = smul.addr %s573, 8
        %s577 = sadd.s32 %s575, %s576
        %s578 = smul.addr %s577, 4
        %s579 = scalar_lea.vmem %s4, %s578
        %s580 = smul.u32 8, %s26
        %p581 = scmp.lt.s32.totalorder %s25, 1
        %s582 = scalar_select %p581, %s25, 1
        %p583 = scmp.lt.s32.totalorder %s580, 7
        %s584 = scalar_select %p583, %s580, 7
        %s585 = smul.addr %s582, 8
        %s586 = sadd.s32 %s584, %s585
        %s587 = smul.addr %s586, 4
        %s588 = scalar_lea.vmem %s5, %s587
        // Predicated region
        $region41: #{tpu_custom_call.1} parent=31 // pred_check
          %p589 = pneg %p123
        $region42: #{tpu_custom_call.1} parent=31 // pred_check_branch
          %591 = sbr.rel (%p589) target = $region44
        $region43: #{tpu_custom_call.1} parent=31 // pred_region
          %s592 = smul.u32 8, %s26
        $region44: #{tpu_custom_call.1} parent=31 // pred_fallthru
          _
        // Predicated region
        $region45: #{tpu_custom_call.1} parent=31 // pred_check
          %p593 = pneg %p151
        $region46: #{tpu_custom_call.1} parent=31 // pred_check_branch
          %595 = sbr.rel (%p593) target = $region48
        $region47: #{tpu_custom_call.1} parent=31 // pred_region
          %s596 = smul.u32 8, %s26
        $region48: #{tpu_custom_call.1} parent=31 // pred_fallthru
          _
        // Predicated region
        $region49: #{tpu_custom_call.1} parent=31 // pred_check
          %p597 = pneg %p179
        $region50: #{tpu_custom_call.1} parent=31 // pred_check_branch
          %599 = sbr.rel (%p597) target = $region52
        $region51: #{tpu_custom_call.1} parent=31 // pred_region
          %s600 = smul.u32 8, %s26
        $region52: #{tpu_custom_call.1} parent=31 // pred_fallthru
          _
      $region32: #{tpu_custom_call.1} parent=5 // pred_fallthru
        _
      %p601 = scmp.le.s32.totalorder 2, %s16
      // Predicated region
      $region53: #{tpu_custom_call.1} parent=5 // pred_check
        %p602 = pneg %p601
      $region54: #{tpu_custom_call.1} parent=5 // pred_check_branch
        %604 = sbr.rel (%p602) target = $region56
      $region55: #{tpu_custom_call.1} parent=5 // pred_region
        %s605 = ssub.s32 %s16, 2
        // Predicated region
        $region57: #{tpu_custom_call.1} parent=55 // pred_check
          %p606 = pneg %p129
        $region58: #{tpu_custom_call.1} parent=55 // pred_check_branch
          %608 = sbr.rel (%p606) target = $region60
        $region59: #{tpu_custom_call.1} parent=55 // pred_region
          %s609 = smul.u32 8, %s28
          %p610 = scmp.lt.s32.totalorder %s27, 1
          %s611 = scalar_select %p610, %s27, 1
          %p612 = scmp.lt.s32.totalorder %s609, 7
          %s613 = scalar_select %p612, %s609, 7
          %s614 = smul.addr %s611, 8
          %s615 = sadd.s32 %s613, %s614
          %s616 = smul.addr %s615, 4
          %s617 = scalar_lea.vmem %s3, %s616
        $region60: #{tpu_custom_call.1} parent=55 // pred_fallthru
          _
        // Predicated region
        $region61: #{tpu_custom_call.1} parent=55 // pred_check
          %p618 = pneg %p157
        $region62: #{tpu_custom_call.1} parent=55 // pred_check_branch
          %620 = sbr.rel (%p618) target = $region64
        $region63: #{tpu_custom_call.1} parent=55 // pred_region
          %s621 = smul.u32 8, %s28
          %p622 = scmp.lt.s32.totalorder %s27, 1
          %s623 = scalar_select %p622, %s27, 1
          %p624 = scmp.lt.s32.totalorder %s621, 7
          %s625 = scalar_select %p624, %s621, 7
          %s626 = smul.addr %s623, 8
          %s627 = sadd.s32 %s625, %s626
          %s628 = smul.addr %s627, 4
          %s629 = scalar_lea.vmem %s4, %s628
        $region64: #{tpu_custom_call.1} parent=55 // pred_fallthru
          _
        // Predicated region
        $region65: #{tpu_custom_call.1} parent=55 // pred_check
          %p630 = pneg %p185
        $region66: #{tpu_custom_call.1} parent=55 // pred_check_branch
          %632 = sbr.rel (%p630) target = $region68
        $region67: #{tpu_custom_call.1} parent=55 // pred_region
          %s633 = smul.u32 8, %s28
          %p634 = scmp.lt.s32.totalorder %s27, 1
          %s635 = scalar_select %p634, %s27, 1
          %p636 = scmp.lt.s32.totalorder %s633, 7
          %s637 = scalar_select %p636, %s633, 7
          %s638 = smul.addr %s635, 8
          %s639 = sadd.s32 %s637, %s638
          %s640 = smul.addr %s639, 4
          %s641 = scalar_lea.vmem %s5, %s640
        $region68: #{tpu_custom_call.1} parent=55 // pred_fallthru
          _
      $region56: #{tpu_custom_call.1} parent=5 // pred_fallthru
        _
    $region6: #{tpu_custom_call.1} parent=1 // loop_footer
      %s20 = sadd.s32 1, %s16
    $region7: #{tpu_custom_call.1} parent=1 // loop_footer_branch
      %15 = sbr.rel target = $region3
    $region8: #{tpu_custom_call.1} parent=1 // loop_exit
      _
    %642 = vsyncpa [#allocation3], 1
    %s643 = scalar_lea.sflag [#allocation3], 1
    %644 = vsyncpa %s643, 1
    %645 = vsyncpa [#allocation5], 1

</llo_original>
